<compile_context>
chip_gen: v5e
topology: v5e:2x2
jax: 0.10.0
libtpu: 0.0.40
codegen_flags: <defaults>
</compile_context>

<pallas_src>
import math

import jax
import jax.numpy as jnp
from jax.experimental import pallas as pl
from jax.experimental.pallas import tpu as pltpu

HIDDEN = 128          # width of fc1 / actor_fc / critic_fc
LANES = 128           # width of the fused head / epilogue slab (one vreg of lanes)
MAX_TILE_B = 1024     # batch rows per grid step (amortizes ~0.35us/step overhead)


def _round_up(x, m):
    return ((x + m - 1) // m) * m


def _make_kernel(action_dim):
    A = action_dim
    H = HIDDEN
    W = LANES
    NOUT = 2 * A + 1   # action | log_prob | value

    def kernel(state_ref, eps_ref, w1_ref, wh_ref, wo_ref, sel_ref, c_ref, out_ref):
        # packed f32 constants row: [b1 | b_actor_fc,b_critic_fc | base | lo | hi]
        b1 = c_ref[0:1, 0:H]                           # (1, H)
        bh = c_ref[0:1, H:3 * H]                       # (1, 2H)
        base = c_ref[0:1, 3 * H:3 * H + W]             # head biases + log_prob const
        lo = c_ref[0:1, 3 * H + W:3 * H + 2 * W]       # -1 in action lanes, -inf else
        hi = c_ref[0:1, 3 * H + 2 * W:3 * H + 3 * W]   # +1 in action lanes, +inf else

        # shared encoder (bf16 MXU operands, f32 accumulate / epilogue)
        state = state_ref[...].astype(jnp.bfloat16)
        x = jnp.maximum(
            jnp.dot(state, w1_ref[...], preferred_element_type=jnp.float32) + b1, 0.0)
        # fused actor/critic hidden layers: one 256-wide matmul
        hc = jnp.maximum(
            jnp.dot(x.astype(jnp.bfloat16), wh_ref[...],
                    preferred_element_type=jnp.float32) + bh, 0.0)
        # fused block-diagonal output heads: mean in lanes 0:A, value in lane 2A
        lin = jnp.dot(hc.astype(jnp.bfloat16), wo_ref[...],
                      preferred_element_type=jnp.float32)                # (TB, W)

        # noise terms, kept f32: std*eps -> lanes 0:A, -0.5*eps^2 -> lanes A:2A
        eps = eps_ref[...]                                               # (TB, A)
        add = (jnp.dot(eps, sel_ref[0], preferred_element_type=jnp.float32)
               + jnp.dot(eps * eps, sel_ref[1], preferred_element_type=jnp.float32))

        pre = lin + add + base
        # clamps only the action lanes (lo/hi are -/+inf everywhere else)
        out = jnp.minimum(jnp.maximum(pre, lo), hi)
        out_ref[...] = out[:, 0:NOUT]

    return kernel


def pack_params(params, state_dim, action_dim):
    """One-time offline packing of the module parameters into fused buffers."""
    H = HIDDEN
    W = LANES
    A = action_dim
    assert 2 * A + 1 <= W, "action_dim too large for the single-slab head"

    # fused hidden-layer weight (H, 2H) and block-diagonal head weight (2H, W)
    wh = jnp.concatenate([params["waf"], params["wcf"]], axis=1)
    wo = jnp.zeros((2 * H, W), jnp.float32)
    wo = wo.at[0:H, 0:A].set(params["wao"])
    wo = wo.at[H:2 * H, 2 * A:2 * A + 1].set(params["wco"])

    # f32 selector matrices for the noise path:
    #   sel[0]: eps      -> std*eps in lanes 0:A
    #   sel[1]: eps*eps  -> -0.5*eps^2 in lanes A:2A
    idx = jnp.arange(A)
    s_std = jnp.zeros((A, W), jnp.float32).at[idx, idx].set(params["std"][0])
    s_sq = jnp.zeros((A, W), jnp.float32).at[idx, A + idx].set(-0.5)
    sel = jnp.stack([s_std, s_sq], axis=0)

    # combined per-lane row: mean bias (0:A), log_prob constant (A:2A), value bias (2A)
    base = jnp.zeros((1, W), jnp.float32)
    base = base.at[:, 0:A].set(params["bao"])
    base = base.at[:, A:2 * A].set(
        -(jnp.log(params["std"]) + 0.5 * math.log(2.0 * math.pi)))
    base = base.at[:, 2 * A:2 * A + 1].set(params["bco"])
    lo = jnp.full((1, W), -jnp.inf, jnp.float32).at[:, 0:A].set(-1.0)
    hi = jnp.full((1, W), jnp.inf, jnp.float32).at[:, 0:A].set(1.0)

    consts = jnp.concatenate(
        [params["b1"], params["baf"], params["bcf"], base, lo, hi], axis=1)

    return {
        "w1": params["w1"].astype(jnp.bfloat16),
        "wh": wh.astype(jnp.bfloat16),
        "wo": wo.astype(jnp.bfloat16),
        "sel": sel,                       # f32
        "consts": consts,                 # f32, shape (1, 3H + 3W)
        "action_dim": A,
        "state_dim": state_dim,
    }


def a2c_forward(state, eps, packed):
    """Fused actor-critic forward: returns (clamped action, log_prob, value)."""
    batch, state_dim = state.shape
    A = packed["action_dim"]
    H = HIDDEN
    W = LANES
    NOUT = 2 * A + 1

    # pad the batch only to the sublane multiple (8); a partial last grid block is
    # handled by Pallas edge masking, so no wrapper-side padding up to TILE_B.
    B8 = _round_up(max(batch, 1), 8)
    if B8 != batch:
        pad = B8 - batch
        state = jnp.pad(state, ((0, pad), (0, 0)))
        eps = jnp.pad(eps, ((0, pad), (0, 0)))

    if B8 <= 16:
        tile_b = B8                       # tiny batch: single grid step
    else:
        # big tiles amortize per-step pipeline overhead; >=2 grid steps so
        # dimension_semantics=("parallel",) can shard across v7x TensorCores.
        tile_b = min(MAX_TILE_B, _round_up((B8 + 1) // 2, 8))
    grid = (pl.cdiv(B8, tile_b),)

    out = pl.pallas_call(
        _make_kernel(A),
        out_shape=jax.ShapeDtypeStruct((B8, NOUT), jnp.float32),
        grid_spec=pltpu.PrefetchScalarGridSpec(
            num_scalar_prefetch=0,
            grid=grid,
            in_specs=[
                pl.BlockSpec((tile_b, state_dim), lambda i: (i, 0)),      # state tile
                pl.BlockSpec((tile_b, A), lambda i: (i, 0)),              # narrow eps
                pl.BlockSpec((state_dim, H), lambda i: (0, 0)),           # w1 (resident)
                pl.BlockSpec((H, 2 * H), lambda i: (0, 0)),               # fused hidden W
                pl.BlockSpec((2 * H, W), lambda i: (0, 0)),               # fused head W
                pl.BlockSpec((2, A, W), lambda i: (0, 0, 0)),             # eps selectors
                pl.BlockSpec((1, 3 * H + 3 * W), lambda i: (0, 0)),       # packed consts
            ],
            out_specs=pl.BlockSpec((tile_b, NOUT), lambda i: (i, 0)),
        ),
        compiler_params=pltpu.CompilerParams(dimension_semantics=("parallel",)),
    )(state, eps, packed["w1"], packed["wh"], packed["wo"],
      packed["sel"], packed["consts"])

    action = out[:batch, 0:A]
    log_prob = out[:batch, A:2 * A]
    value = out[:batch, 2 * A:2 * A + 1]
    return action, log_prob, value


def init_params(key, state_dim, action_dim):
    """Deterministic init mirroring the module's reset_parameters shapes."""
    ks = jax.random.split(key, 10)

    def uni(k, shape, lim):
        return jax.random.uniform(k, shape, jnp.float32, -lim, lim)

    lim_h = 1.0 / math.sqrt(128.0)
    return {
        "w1": uni(ks[0], (state_dim, HIDDEN), lim_h),
        "b1": uni(ks[1], (1, HIDDEN), 1.0 / math.sqrt(state_dim)),
        "waf": uni(ks[2], (HIDDEN, HIDDEN), lim_h),
        "baf": uni(ks[3], (1, HIDDEN), lim_h),
        "wao": uni(ks[4], (HIDDEN, action_dim), 0.003),
        "bao": uni(ks[5], (1, action_dim), lim_h),
        "std": jnp.ones((1, action_dim), jnp.float32),
        "wcf": uni(ks[6], (HIDDEN, HIDDEN), lim_h),
        "bcf": uni(ks[7], (1, HIDDEN), lim_h),
        "wco": uni(ks[8], (HIDDEN, 1), 0.003),
        "bco": uni(ks[9], (1, 1), lim_h),
    }


if __name__ == "__main__":
    state_dim = 16
    action_dim = 4
    batch = 8

    key = jax.random.PRNGKey(0)
    k_params, k_state, k_eps = jax.random.split(key, 3)

    params = init_params(k_params, state_dim, action_dim)
    packed = pack_params(params, state_dim, action_dim)

    state = jax.random.normal(k_state, (batch, state_dim), jnp.float32)
    eps = jax.random.normal(k_eps, (batch, action_dim), jnp.float32)

    action, log_prob, value = a2c_forward(state, eps, packed)
    jax.block_until_ready((action, log_prob, value))

    # plain-JAX f32 reference (kernel matmuls use bf16 operands -> loosened atol
    # on action/value; the log_prob path is pure f32 in the kernel).
    x = jnp.maximum(state @ params["w1"] + params["b1"], 0.0)
    mean = (jnp.maximum(x @ params["waf"] + params["baf"], 0.0) @ params["wao"]
            + params["bao"])
    raw = mean + params["std"] * eps
    ref_action = jnp.clip(raw, -1.0, 1.0)
    ref_logp = (-0.5 * ((raw - mean) / params["std"]) ** 2
                - jnp.log(params["std"]) - 0.5 * math.log(2.0 * math.pi))
    ref_value = (jnp.maximum(x @ params["wcf"] + params["bcf"], 0.0) @ params["wco"]
                 + params["bco"])

    assert jnp.allclose(action, ref_action, atol=2e-2), "action mismatch"
    assert jnp.allclose(log_prob, ref_logp, atol=1e-4), "log_prob mismatch"
    assert jnp.allclose(value, ref_value, atol=2e-2), "value mismatch"

    print("KERNEL_OK")
</pallas_src>

<mosaic_0001>
module attributes {stable_mosaic.version = 11 : i64} {
  func.func @kernel(%arg0: i32, %arg1: memref<8x16xf32, #tpu.memory_space<vmem>>, %arg2: memref<8x4xf32, #tpu.memory_space<vmem>>, %arg3: memref<16x128xbf16, #tpu.memory_space<vmem>>, %arg4: memref<128x256xbf16, #tpu.memory_space<vmem>>, %arg5: memref<256x128xbf16, #tpu.memory_space<vmem>>, %arg6: memref<2x4x128xf32, #tpu.memory_space<vmem>>, %arg7: memref<1x768xf32, #tpu.memory_space<vmem>>, %arg8: memref<8x9xf32, #tpu.memory_space<vmem>>) attributes {dimension_semantics = [#tpu.dimension_semantics<parallel>], iteration_bounds = array<i64: 1>, scalar_prefetch = 0 : i64, scratch_operands = 0 : i64, tpu.core_type = #tpu.core_type<tc>, window_params = [{transform_indices = @transform_0, window_bounds = array<i64: 8, 16>}, {transform_indices = @transform_1, window_bounds = array<i64: 8, 4>}, {pipeline_mode = #tpu.pipeline_mode<synchronous>, transform_indices = @transform_2, window_bounds = array<i64: 16, 128>}, {pipeline_mode = #tpu.pipeline_mode<synchronous>, transform_indices = @transform_3, window_bounds = array<i64: 128, 256>}, {pipeline_mode = #tpu.pipeline_mode<synchronous>, transform_indices = @transform_4, window_bounds = array<i64: 256, 128>}, {pipeline_mode = #tpu.pipeline_mode<synchronous>, transform_indices = @transform_5, window_bounds = array<i64: 2, 4, 128>}, {pipeline_mode = #tpu.pipeline_mode<synchronous>, transform_indices = @transform_6, window_bounds = array<i64: 1, 768>}, {transform_indices = @transform_7, window_bounds = array<i64: 8, 9>}]} {
    %c0 = arith.constant 0 : index
    %c0_0 = arith.constant 0 : index
    %0 = vector.load %arg7[%c0, %c0_0] : memref<1x768xf32, #tpu.memory_space<vmem>>, vector<1x128xf32>
    %c0_1 = arith.constant 0 : index
    %c128 = arith.constant 128 : index
    %1 = vector.load %arg7[%c0_1, %c128] : memref<1x768xf32, #tpu.memory_space<vmem>>, vector<1x256xf32>
    %c0_2 = arith.constant 0 : index
    %c384 = arith.constant 384 : index
    %2 = vector.load %arg7[%c0_2, %c384] : memref<1x768xf32, #tpu.memory_space<vmem>>, vector<1x128xf32>
    %c0_3 = arith.constant 0 : index
    %c512 = arith.constant 512 : index
    %3 = vector.load %arg7[%c0_3, %c512] : memref<1x768xf32, #tpu.memory_space<vmem>>, vector<1x128xf32>
    %c0_4 = arith.constant 0 : index
    %c640 = arith.constant 640 : index
    %4 = vector.load %arg7[%c0_4, %c640] : memref<1x768xf32, #tpu.memory_space<vmem>>, vector<1x128xf32>
    %c0_5 = arith.constant 0 : index
    %c0_6 = arith.constant 0 : index
    %5 = vector.load %arg1[%c0_5, %c0_6] : memref<8x16xf32, #tpu.memory_space<vmem>>, vector<8x16xf32>
    %6 = arith.truncf %5 : vector<8x16xf32> to vector<8x16xbf16>
    %c0_7 = arith.constant 0 : index
    %c0_8 = arith.constant 0 : index
    %7 = vector.load %arg3[%c0_7, %c0_8] : memref<16x128xbf16, #tpu.memory_space<vmem>>, vector<16x128xbf16>
    %cst = arith.constant dense<0.000000e+00> : vector<8x128xf32>
    %8 = tpu.matmul %6, %7, %cst {dimension_numbers = #tpu.dot_dimension_numbers<[1], [0], [0], [1], [0, 0, 1, 1], [], []>} : vector<8x16xbf16>, vector<16x128xbf16>, vector<8x128xf32> -> vector<8x128xf32>
    %9 = vector.broadcast %0 : vector<1x128xf32> to vector<8x128xf32>
    %10 = arith.addf %8, %9 : vector<8x128xf32>
    %cst_9 = arith.constant 0.000000e+00 : f32
    %11 = vector.broadcast %cst_9 : f32 to vector<8x128xf32>
    %12 = arith.maximumf %10, %11 : vector<8x128xf32>
    %13 = arith.truncf %12 : vector<8x128xf32> to vector<8x128xbf16>
    %c0_10 = arith.constant 0 : index
    %c0_11 = arith.constant 0 : index
    %14 = vector.load %arg4[%c0_10, %c0_11] : memref<128x256xbf16, #tpu.memory_space<vmem>>, vector<128x256xbf16>
    %cst_12 = arith.constant dense<0.000000e+00> : vector<8x256xf32>
    %15 = tpu.matmul %13, %14, %cst_12 {dimension_numbers = #tpu.dot_dimension_numbers<[1], [0], [0], [1], [0, 0, 1, 1], [], []>} : vector<8x128xbf16>, vector<128x256xbf16>, vector<8x256xf32> -> vector<8x256xf32>
    %16 = vector.broadcast %1 : vector<1x256xf32> to vector<8x256xf32>
    %17 = arith.addf %15, %16 : vector<8x256xf32>
    %cst_13 = arith.constant 0.000000e+00 : f32
    %18 = vector.broadcast %cst_13 : f32 to vector<8x256xf32>
    %19 = arith.maximumf %17, %18 : vector<8x256xf32>
    %20 = arith.truncf %19 : vector<8x256xf32> to vector<8x256xbf16>
    %c0_14 = arith.constant 0 : index
    %c0_15 = arith.constant 0 : index
    %21 = vector.load %arg5[%c0_14, %c0_15] : memref<256x128xbf16, #tpu.memory_space<vmem>>, vector<256x128xbf16>
    %cst_16 = arith.constant dense<0.000000e+00> : vector<8x128xf32>
    %22 = tpu.matmul %20, %21, %cst_16 {dimension_numbers = #tpu.dot_dimension_numbers<[1], [0], [0], [1], [0, 0, 1, 1], [], []>} : vector<8x256xbf16>, vector<256x128xbf16>, vector<8x128xf32> -> vector<8x128xf32>
    %c0_17 = arith.constant 0 : index
    %c0_18 = arith.constant 0 : index
    %23 = vector.load %arg2[%c0_17, %c0_18] : memref<8x4xf32, #tpu.memory_space<vmem>>, vector<8x4xf32>
    %c0_19 = arith.constant 0 : index
    %c0_20 = arith.constant 0 : index
    %c0_21 = arith.constant 0 : index
    %24 = vector.load %arg6[%c0_19, %c0_20, %c0_21] : memref<2x4x128xf32, #tpu.memory_space<vmem>>, vector<1x4x128xf32>
    %25 = vector.shape_cast %24 : vector<1x4x128xf32> to vector<4x128xf32>
    %cst_22 = arith.constant dense<0.000000e+00> : vector<8x128xf32>
    %26 = tpu.matmul %23, %25, %cst_22 {dimension_numbers = #tpu.dot_dimension_numbers<[1], [0], [0], [1], [0, 0, 1, 1], [], []>} : vector<8x4xf32>, vector<4x128xf32>, vector<8x128xf32> -> vector<8x128xf32>
    %27 = arith.mulf %23, %23 : vector<8x4xf32>
    %c1 = arith.constant 1 : index
    %c0_23 = arith.constant 0 : index
    %c0_24 = arith.constant 0 : index
    %28 = vector.load %arg6[%c1, %c0_23, %c0_24] : memref<2x4x128xf32, #tpu.memory_space<vmem>>, vector<1x4x128xf32>
    %29 = vector.shape_cast %28 : vector<1x4x128xf32> to vector<4x128xf32>
    %cst_25 = arith.constant dense<0.000000e+00> : vector<8x128xf32>
    %30 = tpu.matmul %27, %29, %cst_25 {dimension_numbers = #tpu.dot_dimension_numbers<[1], [0], [0], [1], [0, 0, 1, 1], [], []>} : vector<8x4xf32>, vector<4x128xf32>, vector<8x128xf32> -> vector<8x128xf32>
    %31 = arith.addf %26, %30 : vector<8x128xf32>
    %32 = arith.addf %22, %31 : vector<8x128xf32>
    %33 = vector.broadcast %2 : vector<1x128xf32> to vector<8x128xf32>
    %34 = arith.addf %32, %33 : vector<8x128xf32>
    %35 = vector.broadcast %3 : vector<1x128xf32> to vector<8x128xf32>
    %36 = arith.maximumf %34, %35 : vector<8x128xf32>
    %37 = vector.broadcast %4 : vector<1x128xf32> to vector<8x128xf32>
    %38 = arith.minimumf %36, %37 : vector<8x128xf32>
    %39 = vector.extract_strided_slice %38 {offsets = [0, 0], sizes = [8, 9], strides = [1, 1]} : vector<8x128xf32> to vector<8x9xf32>
    %c0_26 = arith.constant 0 : index
    %c0_27 = arith.constant 0 : index
    %40 = vector.load %arg8[%c0_26, %c0_27] : memref<8x9xf32, #tpu.memory_space<vmem>>, vector<8x9xf32>
    tpu.vector_store %arg8[%c0_26, %c0_27], %39 {strides = array<i32>} : memref<8x9xf32, #tpu.memory_space<vmem>>, vector<8x9xf32>,
    return
  }
  func.func @transform_0(%arg0: i32) -> (i32, i32) {
    %c0_i32 = arith.constant 0 : i32
    %c0_i32_0 = arith.constant 0 : i32
    return %arg0, %c0_i32 : i32, i32
  }
  func.func @transform_1(%arg0: i32) -> (i32, i32) {
    %c0_i32 = arith.constant 0 : i32
    %c0_i32_0 = arith.constant 0 : i32
    return %arg0, %c0_i32 : i32, i32
  }
  func.func @transform_2(%arg0: i32) -> (i32, i32) {
    %c0_i32 = arith.constant 0 : i32
    %c0_i32_0 = arith.constant 0 : i32
    %c0_i32_1 = arith.constant 0 : i32
    return %c0_i32, %c0_i32_0 : i32, i32
  }
  func.func @transform_3(%arg0: i32) -> (i32, i32) {
    %c0_i32 = arith.constant 0 : i32
    %c0_i32_0 = arith.constant 0 : i32
    %c0_i32_1 = arith.constant 0 : i32
    return %c0_i32, %c0_i32_0 : i32, i32
  }
  func.func @transform_4(%arg0: i32) -> (i32, i32) {
    %c0_i32 = arith.constant 0 : i32
    %c0_i32_0 = arith.constant 0 : i32
    %c0_i32_1 = arith.constant 0 : i32
    return %c0_i32, %c0_i32_0 : i32, i32
  }
  func.func @transform_5(%arg0: i32) -> (i32, i32, i32) {
    %c0_i32 = arith.constant 0 : i32
    %c0_i32_0 = arith.constant 0 : i32
    %c0_i32_1 = arith.constant 0 : i32
    %c0_i32_2 = arith.constant 0 : i32
    return %c0_i32, %c0_i32_0, %c0_i32_1 : i32, i32, i32
  }
  func.func @transform_6(%arg0: i32) -> (i32, i32) {
    %c0_i32 = arith.constant 0 : i32
    %c0_i32_0 = arith.constant 0 : i32
    %c0_i32_1 = arith.constant 0 : i32
    return %c0_i32, %c0_i32_0 : i32, i32
  }
  func.func @transform_7(%arg0: i32) -> (i32, i32) {
    %c0_i32 = arith.constant 0 : i32
    %c0_i32_0 = arith.constant 0 : i32
    return %arg0, %c0_i32 : i32, i32
  }
}

</mosaic_0001>

<llo_original>
// kernel: tpu_custom_call.1
$region0: #{tpu_custom_call.1}
  #allocation0 [shape = 'u32[]', space=smem, size = 0x4, offset = 0x4, fixed_abs, tag = 'smem constant byte address 0x4 - core index']
  #allocation1 [shape = 'u32[72,128]{1,0:T(1,128)}', space=vmem, size = 0x9000, scoped, tag = 'internal scratch']
  %s0 = inlined_call_operand.vmem [shape: f32[8,16], index: 0, kind: input, shape index: {}]
  %s1 = inlined_call_operand.vmem [shape: f32[8,4], index: 1, kind: input, shape index: {}]
  %s2 = inlined_call_operand.hbm [shape: bf16[16,128], index: 2, kind: input, shape index: {}]
  %s3 = inlined_call_operand.hbm [shape: bf16[128,256], index: 3, kind: input, shape index: {}]
  %s4 = inlined_call_operand.hbm [shape: bf16[256,128], index: 4, kind: input, shape index: {}]
  %s5 = inlined_call_operand.vmem [shape: f32[2,4,128], index: 5, kind: input, shape index: {}]
  %s6 = inlined_call_operand.hbm [shape: f32[1,768], index: 6, kind: input, shape index: {}]
  %s7 = inlined_call_operand.hbm [shape: f32[8,9], index: 7, kind: output, shape index: {}]
  %s8 = sld [smem:[#allocation0]]
  $region54: #{tpu_custom_call.1} parent=0
    _
  %s10 = ssub.s32 1, %s8
  %s11 = scalar_select 0, %s10, %s8
  $region1: #{tpu_custom_call.1} parent=0
    #allocation2 [shape = 'u8[4096]{0}', space=vmem, size = 0x1000, scoped, tag = 'input window, operand 2, single buffered']
    #allocation3 [shape = 's32[1]{0}', space=sflag, size = 0x4, scoped, tag = 'scoped memory for tpu_custom_call.1']
    #allocation4 [shape = 's32[1]{0}', space=sflag, size = 0x4, scoped, tag = 'scoped memory for tpu_custom_call.1']
    #allocation5 [shape = 'u8[65536]{0}', space=vmem, size = 0x10000, scoped, tag = 'input window, operand 3, single buffered']
    #allocation6 [shape = 's32[1]{0}', space=sflag, size = 0x4, scoped, tag = 'scoped memory for tpu_custom_call.1']
    #allocation7 [shape = 'u8[65536]{0}', space=vmem, size = 0x10000, scoped, tag = 'input window, operand 4, single buffered']
    #allocation8 [shape = 'u8[3072]{0}', space=vmem, size = 0xc00, scoped, tag = 'input window, operand 6, single buffered']
    #allocation9 [shape = 's32[1]{0}', space=sflag, size = 0x4, scoped, tag = 'scoped memory for tpu_custom_call.1']
    #allocation10 [shape = 'u8[4096]{0}', space=vmem, size = 0x1000, scoped, tag = 'output window, operand 0, single buffered']
    %12 = vsyncpa [#allocation3], 0
    %13 = vsyncpa [#allocation6], 0
    %14 = vsyncpa [#allocation9], 0
    %15 = vsyncpa [#allocation4], 0
    // Predicated region
    $region2: #{tpu_custom_call.1} parent=1 // pred_check
      _
    $region3: #{tpu_custom_call.1} parent=1 // pred_check_branch
      %17 = sbr.rel (0) target = $region5
    $region4: #{tpu_custom_call.1} parent=1 // pred_region
      _
    $region5: #{tpu_custom_call.1} parent=1 // pred_fallthru
      _
    // Predicated region
    $region6: #{tpu_custom_call.1} parent=1 // pred_check
      _
    $region7: #{tpu_custom_call.1} parent=1 // pred_check_branch
      %19 = sbr.rel (0) target = $region9
    $region8: #{tpu_custom_call.1} parent=1 // pred_region
      _
    $region9: #{tpu_custom_call.1} parent=1 // pred_fallthru
      _
    // Predicated region
    $region10: #{tpu_custom_call.1} parent=1 // pred_check
      _
    $region11: #{tpu_custom_call.1} parent=1 // pred_check_branch
      %21 = sbr.rel (0) target = $region13
    $region12: #{tpu_custom_call.1} parent=1 // pred_region
      %23 = vsyncadd [#allocation3], 0
      %s24 = sshll.u32 %s2, 4
      %s25 = int_to_ptr.hbm [resolvable:$true] %s24
      %s26 = sshll.u32 [#allocation2], 4
      %s27 = int_to_ptr.vmem [resolvable:$true] %s26
      %32 = dma.hbm_to_vmem [thread:$0]  %s25, 128, %s27, [#allocation3], 64, 64, 4
    $region13: #{tpu_custom_call.1} parent=1 // pred_fallthru
      _
    // Predicated region
    $region14: #{tpu_custom_call.1} parent=1 // pred_check
      _
    $region15: #{tpu_custom_call.1} parent=1 // pred_check_branch
      %34 = sbr.rel (0) target = $region17
    $region16: #{tpu_custom_call.1} parent=1 // pred_region
      %36 = vsyncadd [#allocation6], 0
      %s37 = sshll.u32 %s3, 4
      %s38 = int_to_ptr.hbm [resolvable:$true] %s37
      %s39 = sshll.u32 [#allocation5], 4
      %s40 = int_to_ptr.vmem [resolvable:$true] %s39
      %45 = dma.hbm_to_vmem [thread:$0]  %s38, 2048, %s40, [#allocation6], 128, 128, 8
    $region17: #{tpu_custom_call.1} parent=1 // pred_fallthru
      _
    // Predicated region
    $region18: #{tpu_custom_call.1} parent=1 // pred_check
      _
    $region19: #{tpu_custom_call.1} parent=1 // pred_check_branch
      %47 = sbr.rel (0) target = $region21
    $region20: #{tpu_custom_call.1} parent=1 // pred_region
      %49 = vsyncadd [#allocation6], 0
      %s50 = sshll.u32 %s4, 4
      %s51 = int_to_ptr.hbm [resolvable:$true] %s50
      %s52 = sshll.u32 [#allocation7], 4
      %s53 = int_to_ptr.vmem [resolvable:$true] %s52
      %58 = dma.hbm_to_vmem [thread:$0]  %s51, 2048, %s53, [#allocation6], 64, 64, 4
    $region21: #{tpu_custom_call.1} parent=1 // pred_fallthru
      _
    // Predicated region
    $region22: #{tpu_custom_call.1} parent=1 // pred_check
      _
    $region23: #{tpu_custom_call.1} parent=1 // pred_check_branch
      %60 = sbr.rel (0) target = $region25
    $region24: #{tpu_custom_call.1} parent=1 // pred_region
      _
    $region25: #{tpu_custom_call.1} parent=1 // pred_fallthru
      _
    // Predicated region
    $region26: #{tpu_custom_call.1} parent=1 // pred_check
      _
    $region27: #{tpu_custom_call.1} parent=1 // pred_check_branch
      %62 = sbr.rel (0) target = $region29
    $region28: #{tpu_custom_call.1} parent=1 // pred_region
      %64 = vsyncadd [#allocation9], 0
      %s66 = sshll.u32 %s6, 4
      %s67 = int_to_ptr.hbm [resolvable:$true] %s66
      %s68 = sshll.u32 [#allocation8], 4
      %s69 = int_to_ptr.vmem [resolvable:$true] %s68
      %71 = dma.hbm_to_vmem [thread:$0]  %s67, 96, %s69, [#allocation9]
    $region29: #{tpu_custom_call.1} parent=1 // pred_fallthru
      _
    // Predicated region
    $region30: #{tpu_custom_call.1} parent=1 // pred_check
      _
    $region31: #{tpu_custom_call.1} parent=1 // pred_check_branch
      %73 = sbr.rel (0) target = $region33
    $region32: #{tpu_custom_call.1} parent=1 // pred_region
      %75 = dma.done [#allocation3], 128
    $region33: #{tpu_custom_call.1} parent=1 // pred_fallthru
      _
    // Predicated region
    $region34: #{tpu_custom_call.1} parent=1 // pred_check
      _
    $region35: #{tpu_custom_call.1} parent=1 // pred_check_branch
      %77 = sbr.rel (0) target = $region37
    $region36: #{tpu_custom_call.1} parent=1 // pred_region
      %79 = dma.done [#allocation6], 2048
    $region37: #{tpu_custom_call.1} parent=1 // pred_fallthru
      _
    // Predicated region
    $region38: #{tpu_custom_call.1} parent=1 // pred_check
      _
    $region39: #{tpu_custom_call.1} parent=1 // pred_check_branch
      %81 = sbr.rel (0) target = $region41
    $region40: #{tpu_custom_call.1} parent=1 // pred_region
      %83 = dma.done [#allocation6], 2048
    $region41: #{tpu_custom_call.1} parent=1 // pred_fallthru
      _
    // Predicated region
    $region42: #{tpu_custom_call.1} parent=1 // pred_check
      _
    $region43: #{tpu_custom_call.1} parent=1 // pred_check_branch
      %85 = sbr.rel (0) target = $region45
    $region44: #{tpu_custom_call.1} parent=1 // pred_region
      %87 = dma.done [#allocation9], 96
    $region45: #{tpu_custom_call.1} parent=1 // pred_fallthru
      _
    %v89 = vld [vmem:[#allocation8] sm:$0x1]
    %v90 = vld [vmem:[#allocation8 + $0x1] sm:$0x3]
    %v91 = vld [vmem:[#allocation8 + $0x3] sm:$0x1]
    %v92 = vld [vmem:[#allocation8 + $0x4] sm:$0x1]
    %v93 = vld [vmem:[#allocation8 + $0x5] sm:$0x1]
    %v94 = vld [vmem:[%s0] sm:$0xff]
    %v95 = vpack.c.bf16 %v94, %v94
    %v96 = vld [vmem:[#allocation2] sm:$0xf]
    %v97 = vld [vmem:[#allocation2 + $0x4] sm:$0xf]
    %v99 = vperm.slane %v89, 0
    %v103 = vunpack.c.l.b16 %v96
    %v104 = vunpack.c.l.b16 %v97
    %v105 = vpack.c.b16 %v104, %v103
    %vm107 = vcmask 130048
    %v109 = vsel %vm107, %v95, 0
    %111 = vmatpush.bf16.msra.mxu0 0
    %112 = vmatpush.bf16.msra.mxu0 0
    %113 = vmatpush.bf16.msra.mxu0 0
    %114 = vmatpush.bf16.msra.mxu0 0
    %115 = vmatpush.bf16.msra.mxu0 0
    %116 = vmatpush.bf16.msra.mxu0 0
    %117 = vmatpush.bf16.msra.mxu0 0
    %118 = vmatpush.bf16.msra.mxu0 %v105
    %119 = vmatmul.bf16.gmra.mxu0 %v109
    %v120 = vpop.f32.mrf.mxu0
    %v121 = vadd.f32 %v99, %v120
    %v122 = vpop.f32.mrf.mxu0
    %123 = vdwg.mxu0
    %v124 = vmax.f32 %v121, 0.0
    %v125 = vpack.c.bf16 %v124, %v124
    %v126 = vld [vmem:[#allocation5] sm:$0xff]
    %v127 = vld [vmem:[#allocation5 + $0x8] sm:$0xff]
    %v128 = vld [vmem:[#allocation5 + $0x10] sm:$0xff]
    %v129 = vld [vmem:[#allocation5 + $0x18] sm:$0xff]
    %v130 = vld [vmem:[#allocation5 + $0x20] sm:$0xff]
    %v131 = vld [vmem:[#allocation5 + $0x28] sm:$0xff]
    %v132 = vld [vmem:[#allocation5 + $0x30] sm:$0xff]
    %v133 = vld [vmem:[#allocation5 + $0x38] sm:$0xff]
    %v134 = vld [vmem:[#allocation5 + $0x40] sm:$0xff]
    %v135 = vld [vmem:[#allocation5 + $0x48] sm:$0xff]
    %v136 = vld [vmem:[#allocation5 + $0x50] sm:$0xff]
    %v137 = vld [vmem:[#allocation5 + $0x58] sm:$0xff]
    %v138 = vld [vmem:[#allocation5 + $0x60] sm:$0xff]
    %v139 = vld [vmem:[#allocation5 + $0x68] sm:$0xff]
    %v140 = vld [vmem:[#allocation5 + $0x70] sm:$0xff]
    %v141 = vld [vmem:[#allocation5 + $0x78] sm:$0xff]
    %v143 = vperm.slane %v90, 0
    %v144 = vperm.slane %v90, 1
    %v163 = vunpack.c.l.b16 %v126
    %v164 = vunpack.c.h.b16 %v126
    %v165 = vunpack.c.l.b16 %v127
    %v166 = vunpack.c.h.b16 %v127
    %v167 = vunpack.c.l.b16 %v128
    %v168 = vunpack.c.h.b16 %v128
    %v169 = vunpack.c.l.b16 %v129
    %v170 = vunpack.c.h.b16 %v129
    %v171 = vunpack.c.l.b16 %v130
    %v172 = vunpack.c.h.b16 %v130
    %v173 = vunpack.c.l.b16 %v131
    %v174 = vunpack.c.h.b16 %v131
    %v175 = vunpack.c.l.b16 %v132
    %v176 = vunpack.c.h.b16 %v132
    %v177 = vunpack.c.l.b16 %v133
    %v178 = vunpack.c.h.b16 %v133
    %v179 = vunpack.c.l.b16 %v134
    %v180 = vunpack.c.h.b16 %v134
    %v181 = vunpack.c.l.b16 %v135
    %v182 = vunpack.c.h.b16 %v135
    %v183 = vunpack.c.l.b16 %v136
    %v184 = vunpack.c.h.b16 %v136
    %v185 = vunpack.c.l.b16 %v137
    %v186 = vunpack.c.h.b16 %v137
    %v187 = vunpack.c.l.b16 %v138
    %v188 = vunpack.c.h.b16 %v138
    %v189 = vunpack.c.l.b16 %v139
    %v190 = vunpack.c.h.b16 %v139
    %v191 = vunpack.c.l.b16 %v140
    %v192 = vunpack.c.h.b16 %v140
    %v193 = vunpack.c.l.b16 %v141
    %v194 = vunpack.c.h.b16 %v141
    %v195 = vpack.c.b16 %v165, %v163
    %v196 = vpack.c.b16 %v166, %v164
    %v197 = vpack.c.b16 %v169, %v167
    %v198 = vpack.c.b16 %v170, %v168
    %v199 = vpack.c.b16 %v173, %v171
    %v200 = vpack.c.b16 %v174, %v172
    %v201 = vpack.c.b16 %v177, %v175
    %v202 = vpack.c.b16 %v178, %v176
    %v203 = vpack.c.b16 %v181, %v179
    %v204 = vpack.c.b16 %v182, %v180
    %v205 = vpack.c.b16 %v185, %v183
    %v206 = vpack.c.b16 %v186, %v184
    %v207 = vpack.c.b16 %v189, %v187
    %v208 = vpack.c.b16 %v190, %v188
    %v209 = vpack.c.b16 %v193, %v191
    %v210 = vpack.c.b16 %v194, %v192
    %227 = vmatpush.bf16.msra.mxu0 %v209
    %228 = vmatpush.bf16.msra.mxu0 %v207
    %229 = vmatpush.bf16.msra.mxu0 %v205
    %230 = vmatpush.bf16.msra.mxu0 %v203
    %231 = vmatpush.bf16.msra.mxu0 %v201
    %232 = vmatpush.bf16.msra.mxu0 %v199
    %233 = vmatpush.bf16.msra.mxu0 %v197
    %234 = vmatpush.bf16.msra.mxu0 %v195
    %235 = vmatmul.bf16.gmra.mxu0 %v125
    %v236 = vpop.f32.mrf.mxu0
    %v237 = vadd.f32 %v143, %v236
    %v238 = vpop.f32.mrf.mxu0
    %239 = vdwg.mxu0
    %240 = vmatpush.bf16.msra.mxu0 %v210
    %241 = vmatpush.bf16.msra.mxu0 %v208
    %242 = vmatpush.bf16.msra.mxu0 %v206
    %243 = vmatpush.bf16.msra.mxu0 %v204
    %244 = vmatpush.bf16.msra.mxu0 %v202
    %245 = vmatpush.bf16.msra.mxu0 %v200
    %246 = vmatpush.bf16.msra.mxu0 %v198
    %247 = vmatpush.bf16.msra.mxu0 %v196
    %248 = vmatmul.bf16.gmra.mxu0 %v125
    %v249 = vpop.f32.mrf.mxu0
    %v250 = vadd.f32 %v144, %v249
    %v251 = vpop.f32.mrf.mxu0
    %252 = vdwg.mxu0
    %v253 = vmax.f32 %v237, 0.0
    %v254 = vmax.f32 %v250, 0.0
    %v255 = vpack.c.bf16 %v253, %v253
    %v256 = vpack.c.bf16 %v254, %v254
    %v257 = vld [vmem:[#allocation7] sm:$0xf]
    %v258 = vld [vmem:[#allocation7 + $0x4] sm:$0xf]
    %v259 = vld [vmem:[#allocation7 + $0x8] sm:$0xf]
    %v260 = vld [vmem:[#allocation7 + $0xc] sm:$0xf]
    %v261 = vld [vmem:[#allocation7 + $0x10] sm:$0xf]
    %v262 = vld [vmem:[#allocation7 + $0x14] sm:$0xf]
    %v263 = vld [vmem:[#allocation7 + $0x18] sm:$0xf]
    %v264 = vld [vmem:[#allocation7 + $0x1c] sm:$0xf]
    %v265 = vld [vmem:[#allocation7 + $0x20] sm:$0xf]
    %v266 = vld [vmem:[#allocation7 + $0x24] sm:$0xf]
    %v267 = vld [vmem:[#allocation7 + $0x28] sm:$0xf]
    %v268 = vld [vmem:[#allocation7 + $0x2c] sm:$0xf]
    %v269 = vld [vmem:[#allocation7 + $0x30] sm:$0xf]
    %v270 = vld [vmem:[#allocation7 + $0x34] sm:$0xf]
    %v271 = vld [vmem:[#allocation7 + $0x38] sm:$0xf]
    %v272 = vld [vmem:[#allocation7 + $0x3c] sm:$0xf]
    %v273 = vld [vmem:[#allocation7 + $0x40] sm:$0xf]
    %v274 = vld [vmem:[#allocation7 + $0x44] sm:$0xf]
    %v275 = vld [vmem:[#allocation7 + $0x48] sm:$0xf]
    %v276 = vld [vmem:[#allocation7 + $0x4c] sm:$0xf]
    %v277 = vld [vmem:[#allocation7 + $0x50] sm:$0xf]
    %v278 = vld [vmem:[#allocation7 + $0x54] sm:$0xf]
    %v279 = vld [vmem:[#allocation7 + $0x58] sm:$0xf]
    %v280 = vld [vmem:[#allocation7 + $0x5c] sm:$0xf]
    %v281 = vld [vmem:[#allocation7 + $0x60] sm:$0xf]
    %v282 = vld [vmem:[#allocation7 + $0x64] sm:$0xf]
    %v283 = vld [vmem:[#allocation7 + $0x68] sm:$0xf]
    %v284 = vld [vmem:[#allocation7 + $0x6c] sm:$0xf]
    %v285 = vld [vmem:[#allocation7 + $0x70] sm:$0xf]
    %v286 = vld [vmem:[#allocation7 + $0x74] sm:$0xf]
    %v287 = vld [vmem:[#allocation7 + $0x78] sm:$0xf]
    %v288 = vld [vmem:[#allocation7 + $0x7c] sm:$0xf]
    %v289 = vld [vmem:[%s1] sm:$0xff]
    %v290 = vld [vmem:[%s5] sm:$0xf]
    %v291 = vmul.f32 %v289, %v289
    %s292 = scalar_lea.vmem %s5, 4
    %v293 = vld [vmem:[%s292] sm:$0xf]
    %vm294 = vcmask 31744
    %v296 = vsel %vm294, %v291, 0
    %vm298 = vcmask 1043456
    %v300 = vsel %vm298, %v293, 0
    %302 = vmatpush.msra.mxu0 0.0
    %303 = vmatpush.msra.mxu0 0.0
    %304 = vmatpush.msra.mxu0 0.0
    %305 = vmatpush.msra.mxu0 0.0
    %306 = vmatpush.msra.mxu0 0.0
    %307 = vmatpush.msra.mxu0 0.0
    %308 = vmatpush.msra.mxu0 0.0
    %309 = vmatpush.msra.mxu0 0.0
    %310 = vmatpush.msra.mxu0 0.0
    %311 = vmatpush.msra.mxu0 0.0
    %312 = vmatpush.msra.mxu0 0.0
    %313 = vmatpush.msra.mxu0 0.0
    %314 = vmatpush.msra.mxu0 0.0
    %315 = vmatpush.msra.mxu0 0.0
    %316 = vmatpush.msra.mxu0 0.0
    %317 = vmatpush.msra.mxu0 %v300
    %318 = vmatmul.f32.gmra.mxu0 %v296
    %v319 = vpop.f32.mrf.mxu0
    %v320 = vadd.f32 0.0, %v319
    %321 = vdwg.mxu0
    %v323 = vsel %vm294, %v289, 0
    %v326 = vsel %vm298, %v290, 0
    %328 = vmatpush.msra.mxu0 0.0
    %329 = vmatpush.msra.mxu0 0.0
    %330 = vmatpush.msra.mxu0 0.0
    %331 = vmatpush.msra.mxu0 0.0
    %332 = vmatpush.msra.mxu0 0.0
    %333 = vmatpush.msra.mxu0 0.0
    %334 = vmatpush.msra.mxu0 0.0
    %335 = vmatpush.msra.mxu0 0.0
    %336 = vmatpush.msra.mxu0 0.0
    %337 = vmatpush.msra.mxu0 0.0
    %338 = vmatpush.msra.mxu0 0.0
    %339 = vmatpush.msra.mxu0 0.0
    %340 = vmatpush.msra.mxu0 0.0
    %341 = vmatpush.msra.mxu0 0.0
    %342 = vmatpush.msra.mxu0 0.0
    %343 = vmatpush.msra.mxu0 %v326
    %344 = vmatmul.f32.gmra.mxu0 %v323
    %v345 = vpop.f32.mrf.mxu0
    %v346 = vadd.f32 %v320, %v345
    %347 = vdwg.mxu0
    %v380 = vunpack.c.l.b16 %v257
    %v381 = vunpack.c.l.b16 %v258
    %v382 = vunpack.c.l.b16 %v259
    %v383 = vunpack.c.l.b16 %v260
    %v384 = vunpack.c.l.b16 %v261
    %v385 = vunpack.c.l.b16 %v262
    %v386 = vunpack.c.l.b16 %v263
    %v387 = vunpack.c.l.b16 %v264
    %v388 = vunpack.c.l.b16 %v265
    %v389 = vunpack.c.l.b16 %v266
    %v390 = vunpack.c.l.b16 %v267
    %v391 = vunpack.c.l.b16 %v268
    %v392 = vunpack.c.l.b16 %v269
    %v393 = vunpack.c.l.b16 %v270
    %v394 = vunpack.c.l.b16 %v271
    %v395 = vunpack.c.l.b16 %v272
    %v396 = vunpack.c.l.b16 %v273
    %v397 = vunpack.c.l.b16 %v274
    %v398 = vunpack.c.l.b16 %v275
    %v399 = vunpack.c.l.b16 %v276
    %v400 = vunpack.c.l.b16 %v277
    %v401 = vunpack.c.l.b16 %v278
    %v402 = vunpack.c.l.b16 %v279
    %v403 = vunpack.c.l.b16 %v280
    %v404 = vunpack.c.l.b16 %v281
    %v405 = vunpack.c.l.b16 %v282
    %v406 = vunpack.c.l.b16 %v283
    %v407 = vunpack.c.l.b16 %v284
    %v408 = vunpack.c.l.b16 %v285
    %v409 = vunpack.c.l.b16 %v286
    %v410 = vunpack.c.l.b16 %v287
    %v411 = vunpack.c.l.b16 %v288
    %v412 = vpack.c.b16 %v381, %v380
    %v413 = vpack.c.b16 %v383, %v382
    %v414 = vpack.c.b16 %v385, %v384
    %v415 = vpack.c.b16 %v387, %v386
    %v416 = vpack.c.b16 %v389, %v388
    %v417 = vpack.c.b16 %v391, %v390
    %v418 = vpack.c.b16 %v393, %v392
    %v419 = vpack.c.b16 %v395, %v394
    %v420 = vpack.c.b16 %v397, %v396
    %v421 = vpack.c.b16 %v399, %v398
    %v422 = vpack.c.b16 %v401, %v400
    %v423 = vpack.c.b16 %v403, %v402
    %v424 = vpack.c.b16 %v405, %v404
    %v425 = vpack.c.b16 %v407, %v406
    %v426 = vpack.c.b16 %v409, %v408
    %v427 = vpack.c.b16 %v411, %v410
    %444 = vmatpush.bf16.msra.mxu0 %v419
    %445 = vmatpush.bf16.msra.mxu0 %v418
    %446 = vmatpush.bf16.msra.mxu0 %v417
    %447 = vmatpush.bf16.msra.mxu0 %v416
    %448 = vmatpush.bf16.msra.mxu0 %v415
    %449 = vmatpush.bf16.msra.mxu0 %v414
    %450 = vmatpush.bf16.msra.mxu0 %v413
    %451 = vmatpush.bf16.msra.mxu0 %v412
    %452 = vmatmul.bf16.gmra.mxu0 %v255
    %v453 = vpop.f32.mrf.mxu0
    %v454 = vadd.f32 %v346, %v453
    %v455 = vpop.f32.mrf.mxu0
    %456 = vdwg.mxu0
    %457 = vmatpush.bf16.msra.mxu0 %v427
    %458 = vmatpush.bf16.msra.mxu0 %v426
    %459 = vmatpush.bf16.msra.mxu0 %v425
    %460 = vmatpush.bf16.msra.mxu0 %v424
    %461 = vmatpush.bf16.msra.mxu0 %v423
    %462 = vmatpush.bf16.msra.mxu0 %v422
    %463 = vmatpush.bf16.msra.mxu0 %v421
    %464 = vmatpush.bf16.msra.mxu0 %v420
    %465 = vmatmul.bf16.gmra.mxu0 %v256
    %v466 = vpop.f32.mrf.mxu0
    %v467 = vadd.f32 %v454, %v466
    %v468 = vpop.f32.mrf.mxu0
    %469 = vdwg.mxu0
    %v471 = vperm.slane %v91, 0
    %v473 = vadd.f32 %v467, %v471
    %v475 = vperm.slane %v92, 0
    %v477 = vmax.f32 %v473, %v475
    %v479 = vperm.slane %v93, 0
    %v481 = vmin.f32 %v477, %v479
    %vm482 = vcmask 72704
    %483 = vst.msk [vmem:[#allocation10] sm:$0xff] %vm482, %v481
    // Predicated region
    $region46: #{tpu_custom_call.1} parent=1 // pred_check
      _
    $region47: #{tpu_custom_call.1} parent=1 // pred_check_branch
      %485 = sbr.rel (0) target = $region49
    $region48: #{tpu_custom_call.1} parent=1 // pred_region
      %487 = vsyncadd [#allocation4], 0
      %s489 = sshll.u32 [#allocation10], 4
      %s490 = int_to_ptr.vmem [resolvable:$true] %s489
      %s491 = sshll.u32 %s7, 4
      %s492 = int_to_ptr.hbm [resolvable:$true] %s491
      %494 = dma.vmem_to_hbm [thread:$0]  %s490, 128, %s492, [#allocation4]
    $region49: #{tpu_custom_call.1} parent=1 // pred_fallthru
      _
    // Predicated region
    $region50: #{tpu_custom_call.1} parent=1 // pred_check
      _
    $region51: #{tpu_custom_call.1} parent=1 // pred_check_branch
      %496 = sbr.rel (0) target = $region53
    $region52: #{tpu_custom_call.1} parent=1 // pred_region
      %498 = dma.done [#allocation4], 128
    $region53: #{tpu_custom_call.1} parent=1 // pred_fallthru
      _
    %499 = vsyncpa [#allocation3], 1
    %500 = vsyncpa [#allocation6], 1
    %501 = vsyncpa [#allocation9], 1
    %502 = vsyncpa [#allocation4], 1

</llo_original>
